<compile_context>
chip_gen: v7x
topology: tpu7x:2x2x1
jax: 0.10.0
libtpu: 0.0.40
codegen_flags: <defaults>
</compile_context>

<pallas_src>
import functools

import jax
import jax.numpy as jnp
import numpy as np
from jax.experimental import pallas as pl
from jax.experimental.pallas import tpu as pltpu


def _locked_dropout_kernel(x_ref, mask_ref, o_ref):
    # x_ref: (bB, tT, H), mask_ref: (bB, 1, H) -> broadcast over the time tile.
    o_ref[...] = x_ref[...] * mask_ref[...]


def _choose_tiles(B, T, H, itemsize, target_bytes=2 << 20):
    """Pick (batch-per-block, time-tile) so one x block is ~target_bytes."""
    row_bytes = H * itemsize
    slab_bytes = T * row_bytes
    if slab_bytes > target_bytes:
        # Tile the time axis; second-minor block dim must be a multiple of 8.
        rows = max(8, (target_bytes // max(row_bytes, 1)) // 8 * 8)
        return 1, int(min(rows, T))
    # Whole sequence fits: pack several batch elements per grid step instead.
    bB = int(max(1, min(B, target_bytes // max(slab_bytes, 1))))
    return bB, T


def locked_dropout_mc(x, key, *, dropout_rate=0.5, batch_first=True,
                      activate=True, donate=False):
    """Pallas implementation of LockedDropoutMC.forward.

    x:   (B, T, H) if batch_first else (T, B, H).
    key: jax PRNG key controlling the Bernoulli mask.
    """
    if (not activate) or dropout_rate == 0.0:
        return x
    if not (0.0 < float(dropout_rate) < 1.0):
        raise ValueError(f"dropout_rate must be in (0, 1), got {dropout_rate}")

    if not batch_first:
        # Torch draws the mask over (1, B, H) and broadcasts over dim 0 (time).
        # Move to (B, T, H), run the same kernel, move back.  (glue, not hot path)
        x_bth = jnp.swapaxes(x, 0, 1)
        out = locked_dropout_mc(x_bth, key, dropout_rate=dropout_rate,
                                batch_first=True, activate=True, donate=donate)
        return jnp.swapaxes(out, 0, 1)

    B, T, H = x.shape
    keep_prob = 1.0 - float(dropout_rate)

    # One Bernoulli draw per (batch, feature), locked across time.  Mask is tiny
    # (B*H) and is built in plain JAX; it lives in x.dtype exactly like torch's
    # `x.data.new(...).bernoulli_(1-p) / (1-p)`.
    # TODO(synk): in-kernel mask generation via pltpu.prng_* is TPU-only (no
    # interpret/CPU lowering), so the draw stays outside the kernel.
    keep = jax.random.bernoulli(key, p=keep_prob, shape=(B, 1, H))
    mask = keep.astype(x.dtype) / jnp.asarray(keep_prob, dtype=x.dtype)

    itemsize = jnp.dtype(x.dtype).itemsize
    bB, tT = _choose_tiles(B, T, H, itemsize)
    grid = (pl.cdiv(B, bB), pl.cdiv(T, tT))

    # Explicit VMEM budget: in + out blocks double-buffered, plus the mask block.
    x_block_bytes = bB * tT * H * itemsize
    mask_block_bytes = bB * H * itemsize
    vmem_needed = 4 * x_block_bytes + 2 * mask_block_bytes
    vmem_limit = int(min(48 << 20, max(16 << 20, 2 * vmem_needed)))

    cost = pl.CostEstimate(
        flops=B * T * H,
        transcendentals=0,
        bytes_accessed=2 * B * T * H * itemsize + B * H * itemsize,
    )

    return pl.pallas_call(
        _locked_dropout_kernel,
        out_shape=jax.ShapeDtypeStruct((B, T, H), x.dtype),
        grid=grid,
        in_specs=[
            pl.BlockSpec((bB, tT, H), lambda i, j: (i, j, 0)),   # x tile
            pl.BlockSpec((bB, 1, H), lambda i, j: (i, 0, 0)),    # mask: no dep on j
        ],
        out_specs=pl.BlockSpec((bB, tT, H), lambda i, j: (i, j, 0)),
        compiler_params=pltpu.CompilerParams(
            dimension_semantics=("parallel", "parallel"),
            vmem_limit_bytes=vmem_limit,
        ),
        cost_estimate=cost,
        input_output_aliases={0: 0} if donate else {},
    )(x, mask)


if __name__ == "__main__":
    root = jax.random.PRNGKey(0)
    kx, km = jax.random.split(root)

    B, T, H = 2, 8, 128
    dropout_rate = 0.5

    x = jax.random.normal(kx, (B, T, H), dtype=jnp.float32)

    out = locked_dropout_mc(x, km, dropout_rate=dropout_rate,
                            batch_first=True, activate=True)
    out = jax.block_until_ready(out)

    # --- sanity checks on the locked-dropout semantics -----------------------
    x_np = np.asarray(x)
    out_np = np.asarray(out)
    ratio = out_np / x_np  # x ~ N(0,1): no exact zeros in practice
    scale = 1.0 / (1.0 - dropout_rate)

    # 1) every element was either dropped (0) or scaled by 1/(1-p)
    assert np.all(np.isclose(ratio, 0.0, atol=1e-5) | np.isclose(ratio, scale, atol=1e-4)), \
        "values must be 0 or x/(1-p)"
    # 2) the mask is locked across the time axis (same per (batch, feature))
    assert np.allclose(ratio, ratio[:, :1, :], atol=1e-4), \
        "mask must be identical across the sequence dimension"
    # 3) the two batch elements got (almost surely) different masks
    assert not np.allclose(ratio[0, 0], ratio[1, 0]), "per-batch masks should differ"
    # 4) eval / deactivated path is identity
    out_eval = locked_dropout_mc(x, km, dropout_rate=dropout_rate, activate=False)
    assert np.array_equal(np.asarray(out_eval), x_np)
    # 5) batch_first=False path: x is (T, B, H), mask locked over dim 0 (time)
    x_tbh = jnp.swapaxes(x, 0, 1)
    out_tbh = jax.block_until_ready(
        locked_dropout_mc(x_tbh, km, dropout_rate=dropout_rate,
                          batch_first=False, activate=True))
    r_tbh = np.asarray(out_tbh) / np.asarray(x_tbh)
    assert np.allclose(r_tbh, r_tbh[:1, :, :], atol=1e-4), \
        "batch_first=False mask must be locked across time (dim 0)"

    print("KERNEL_OK")
</pallas_src>

<mosaic_0001>
module attributes {stable_mosaic.version = 11 : i64} {
  func.func @_locked_dropout_kernel(%arg0: i32, %arg1: i32, %arg2: memref<2x8x128xf32, #tpu.memory_space<vmem>>, %arg3: memref<2x1x128xf32, #tpu.memory_space<vmem>>, %arg4: memref<2x8x128xf32, #tpu.memory_space<vmem>>) attributes {dimension_semantics = [#tpu.dimension_semantics<parallel>, #tpu.dimension_semantics<parallel>], iteration_bounds = array<i64: 1, 1>, scalar_prefetch = 0 : i64, scratch_operands = 0 : i64, tpu.core_type = #tpu.core_type<tc>, window_params = [{transform_indices = @transform_0, window_bounds = array<i64: 2, 8, 128>}, {transform_indices = @transform_1, window_bounds = array<i64: 2, 1, 128>}, {transform_indices = @transform_2, window_bounds = array<i64: 2, 8, 128>}]} {
    %c0 = arith.constant 0 : index
    %c0_0 = arith.constant 0 : index
    %c0_1 = arith.constant 0 : index
    %0 = vector.load %arg2[%c0, %c0_0, %c0_1] : memref<2x8x128xf32, #tpu.memory_space<vmem>>, vector<2x8x128xf32>
    %c0_2 = arith.constant 0 : index
    %c0_3 = arith.constant 0 : index
    %c0_4 = arith.constant 0 : index
    %1 = vector.load %arg3[%c0_2, %c0_3, %c0_4] : memref<2x1x128xf32, #tpu.memory_space<vmem>>, vector<2x1x128xf32>
    %2 = vector.broadcast %1 : vector<2x1x128xf32> to vector<2x8x128xf32>
    %3 = arith.mulf %0, %2 : vector<2x8x128xf32>
    %c0_5 = arith.constant 0 : index
    %c0_6 = arith.constant 0 : index
    %c0_7 = arith.constant 0 : index
    %4 = vector.load %arg4[%c0_5, %c0_6, %c0_7] : memref<2x8x128xf32, #tpu.memory_space<vmem>>, vector<2x8x128xf32>
    tpu.vector_store %arg4[%c0_5, %c0_6, %c0_7], %3 {strides = array<i32>} : memref<2x8x128xf32, #tpu.memory_space<vmem>>, vector<2x8x128xf32>,
    return
  }
  func.func @transform_0(%arg0: i32, %arg1: i32) -> (i32, i32, i32) {
    %c0_i32 = arith.constant 0 : i32
    %c0_i32_0 = arith.constant 0 : i32
    return %arg0, %arg1, %c0_i32 : i32, i32, i32
  }
  func.func @transform_1(%arg0: i32, %arg1: i32) -> (i32, i32, i32) {
    %c0_i32 = arith.constant 0 : i32
    %c0_i32_0 = arith.constant 0 : i32
    %c0_i32_1 = arith.constant 0 : i32
    return %arg0, %c0_i32, %c0_i32_0 : i32, i32, i32
  }
  func.func @transform_2(%arg0: i32, %arg1: i32) -> (i32, i32, i32) {
    %c0_i32 = arith.constant 0 : i32
    %c0_i32_0 = arith.constant 0 : i32
    return %arg0, %arg1, %c0_i32 : i32, i32, i32
  }
}

</mosaic_0001>

<llo_original>
// kernel: tpu_custom_call.1
$region0: #{tpu_custom_call.1}
  #allocation0 [shape = 'u32[]', space=smem, size = 0x4, offset = 0x4, fixed_abs, tag = 'smem constant byte address 0x4 - core index']
  #allocation1 [shape = 'u32[144,128]{1,0:T(1,128)}', space=vmem, size = 0x12000, scoped, tag = 'internal scratch']
  %s0 = inlined_call_operand.hbm [shape: f32[2,8,128], index: 0, kind: input, shape index: {}]
  %s1 = inlined_call_operand.vmem [shape: f32[2,1,128], index: 1, kind: input, shape index: {}]
  %s2 = inlined_call_operand.hbm [shape: f32[2,8,128], index: 2, kind: output, shape index: {}]
  %s3 = sld [smem:[#allocation0]]
  $region22: #{tpu_custom_call.1} parent=0
    _
  %s5 = ssub.s32 1, %s3
  %s6 = scalar_select 0, %s5, %s3
  $region1: #{tpu_custom_call.1} parent=0
    #allocation2 [shape = 'u8[8192]{0}', space=vmem, size = 0x2000, scoped, tag = 'input window, operand 0, single buffered']
    #allocation3 [shape = 's32[1]{0}', space=sflag, size = 0x4, scoped, tag = 'scoped memory for tpu_custom_call.1']
    #allocation4 [shape = 's32[1]{0}', space=sflag, size = 0x4, scoped, tag = 'scoped memory for tpu_custom_call.1']
    #allocation5 [shape = 'u8[8192]{0}', space=vmem, size = 0x2000, scoped, tag = 'output window, operand 0, single buffered']
    %7 = vsyncpa [#allocation3], 0
    %8 = vsyncpa [#allocation4], 0
    // Predicated region
    $region2: #{tpu_custom_call.1} parent=1 // pred_check
      _
    $region3: #{tpu_custom_call.1} parent=1 // pred_check_branch
      %10 = sbr.rel (0) target = $region5
    $region4: #{tpu_custom_call.1} parent=1 // pred_region
      %s12 = ssub.s32 256, 256
      %13 = vsyncadd [#allocation3], %s12
      %s14 = sshll.u32 [#allocation2], 4
      %s15 = int_to_ptr.vmem [resolvable:$true] %s14
      %20 = dma.hbm_to_vmem [thread:$0]  %s0, 256, %s15, [#allocation3], 128, 128, 8
    $region5: #{tpu_custom_call.1} parent=1 // pred_fallthru
      _
    // Predicated region
    $region6: #{tpu_custom_call.1} parent=1 // pred_check
      _
    $region7: #{tpu_custom_call.1} parent=1 // pred_check_branch
      %22 = sbr.rel (0) target = $region9
    $region8: #{tpu_custom_call.1} parent=1 // pred_region
      _
    $region9: #{tpu_custom_call.1} parent=1 // pred_fallthru
      _
    // Predicated region
    $region10: #{tpu_custom_call.1} parent=1 // pred_check
      _
    $region11: #{tpu_custom_call.1} parent=1 // pred_check_branch
      %24 = sbr.rel (0) target = $region13
    $region12: #{tpu_custom_call.1} parent=1 // pred_region
      %25 = dma.done [#allocation3], 256
    $region13: #{tpu_custom_call.1} parent=1 // pred_fallthru
      _
    %v26 = vld [vmem:[#allocation2] sm:$0xff]
    %v27 = vld [vmem:[#allocation2 + $0x8] sm:$0xff]
    %v28 = vld [vmem:[%s1] sm:$0x1]
    %v29 = vld [vmem:[%s1 + $0x1] sm:$0x1]
    %v32 = vlaneseq
    %v33 = vshrl.u32 %v32, 7
    %v34 = vsub.s32 0, %v33
    %v35 = vrot.slane %v28, %v34
    %v36 = vlaneseq
    %v37 = vshrl.u32 %v36, 7
    %v38 = vsub.s32 0, %v37
    %v39 = vrot.slane %v29, %v38
    %v42 = vmul.f32 %v26, %v35
    %v43 = vmul.f32 %v27, %v39
    %44 = vst [vmem:[#allocation5] sm:$0xff] %v42
    %45 = vst [vmem:[#allocation5 + $0x8] sm:$0xff] %v43
    // Predicated region
    $region14: #{tpu_custom_call.1} parent=1 // pred_check
      _
    $region15: #{tpu_custom_call.1} parent=1 // pred_check_branch
      %47 = sbr.rel (0) target = $region17
    $region16: #{tpu_custom_call.1} parent=1 // pred_region
      %s49 = ssub.s32 256, 256
      %50 = vsyncadd [#allocation4], %s49
      %s51 = sshll.u32 [#allocation5], 4
      %s52 = int_to_ptr.vmem [resolvable:$true] %s51
      %57 = dma.vmem_to_hbm [thread:$0]  %s52, 256, %s2, [#allocation4], 128, 128, 8
    $region17: #{tpu_custom_call.1} parent=1 // pred_fallthru
      _
    // Predicated region
    $region18: #{tpu_custom_call.1} parent=1 // pred_check
      _
    $region19: #{tpu_custom_call.1} parent=1 // pred_check_branch
      %59 = sbr.rel (0) target = $region21
    $region20: #{tpu_custom_call.1} parent=1 // pred_region
      %60 = dma.done [#allocation4], 256
    $region21: #{tpu_custom_call.1} parent=1 // pred_fallthru
      _
    %61 = vsyncpa [#allocation3], 1
    %62 = vsyncpa [#allocation4], 1

</llo_original>
